<compile_context>
chip_gen: v7x
topology: tpu7x:2x2x1
jax: 0.10.0
libtpu: 0.0.40
codegen_flags: <defaults>
</compile_context>

<pallas_src>
import jax
import jax.numpy as jnp
from jax.experimental import pallas as pl
from jax.experimental.pallas import tpu as pltpu


def _mlp_kernel(x_ref,
                w1_ref, b1_ref,
                w2_ref, b2_ref,
                w3_ref, b3_ref,
                wf_ref, bf_ref,
                o_ref):
    """Fused 1x1-conv chain + FC on one (TILE_B, channels) batch tile."""
    x = x_ref[...]                                                     # (TB, 10)

    h = jnp.dot(x, w1_ref[...], preferred_element_type=jnp.float32)   # (TB, 32)
    h = jnp.maximum(h + b1_ref[...], 0.0)                             # relu(conv1)

    h = jnp.dot(h, w2_ref[...], preferred_element_type=jnp.float32)   # (TB, 16)
    h = jnp.maximum(h + b2_ref[...], 0.0)                             # relu(conv2)

    h = jnp.dot(h, w3_ref[...], preferred_element_type=jnp.float32)   # (TB, 8)
    h = jnp.maximum(h + b3_ref[...], 0.0)                             # relu(conv3)

    o = jnp.dot(h, wf_ref[...], preferred_element_type=jnp.float32)   # (TB, 64)
    o_ref[...] = (o + bf_ref[...]).astype(o_ref.dtype)                # fc


def _round_up(n, m):
    return (n + m - 1) // m * m


def pt1d_conv_branch(x_nchw, params, tile_b=1024):
    """x_nchw: (B, 10, 1, 1) float32 -> (B, 64) float32."""
    B = x_nchw.shape[0]
    assert x_nchw.shape[1:] == (10, 1, 1), "module requires (B, 10, 1, 1) input"

    (w1, b1), (w2, b2), (w3, b3), (wf, bf) = params

    # Layout plumbing (tiny, one-time): PyTorch (cout, cin) weights -> (cin, cout)
    # so the kernel computes `x @ W`; biases -> (1, cout) rows that broadcast
    # over the sublane (batch) axis.
    wts = [w.T for w in (w1, w2, w3, wf)]
    bs = [b.reshape(1, -1) for b in (b1, b2, b3, bf)]

    # Free reshape: (B, 10, 1, 1) -> (B, 10); no data movement, exact PyTorch layout.
    x = x_nchw.reshape(B, 10)

    # Batch tile: multiple of 128, capped by (padded) B; default 1024.
    tile_b = max(128, min(int(tile_b), _round_up(B, 128)))
    tile_b = _round_up(tile_b, 128)
    Bp = _round_up(B, tile_b)
    if Bp != B:
        x = jnp.pad(x, ((0, Bp - B), (0, 0)))          # zero-pad tail batch rows

    grid = (Bp // tile_b,)

    def const_spec(arr):
        # Full-array block, same block every grid step -> stays resident in VMEM.
        return pl.BlockSpec(arr.shape, lambda i: (0, 0))

    flops = 2 * Bp * (10 * 32 + 32 * 16 + 16 * 8 + 8 * 64)
    weight_bytes = 4 * sum(int(a.size) for pair in params for a in pair)
    bytes_accessed = 4 * Bp * (10 + 64) + weight_bytes

    out = pl.pallas_call(
        _mlp_kernel,
        out_shape=jax.ShapeDtypeStruct((Bp, 64), jnp.float32),
        grid=grid,
        in_specs=[
            pl.BlockSpec((tile_b, 10), lambda i: (i, 0)),   # x batch tile
            const_spec(wts[0]), const_spec(bs[0]),
            const_spec(wts[1]), const_spec(bs[1]),
            const_spec(wts[2]), const_spec(bs[2]),
            const_spec(wts[3]), const_spec(bs[3]),
        ],
        out_specs=pl.BlockSpec((tile_b, 64), lambda i: (i, 0)),
        compiler_params=pltpu.CompilerParams(
            dimension_semantics=("parallel",),              # megacore sharding
            vmem_limit_bytes=32 << 20,
        ),
        cost_estimate=pl.CostEstimate(
            flops=flops, transcendentals=0, bytes_accessed=bytes_accessed),
    )(x, wts[0], bs[0], wts[1], bs[1], wts[2], bs[2], wts[3], bs[3])

    # Drop the padded batch rows.
    return out[:B]


def init_params(key):
    """Deterministic synthetic weights in native PyTorch layout.

    Conv2d(cin, cout, k=1) weight (cout, cin, 1, 1) is stored squeezed as
    (cout, cin); Linear(8, 64) weight is (64, 8).  Biases are (cout,) vectors.
    """
    dims = [(10, 32), (32, 16), (16, 8), (8, 64)]
    keys = jax.random.split(key, 2 * len(dims))
    params = []
    for i, (cin, cout) in enumerate(dims):
        scale = 1.0 / jnp.sqrt(jnp.float32(cin))
        w = jax.random.uniform(keys[2 * i], (cout, cin), jnp.float32,
                               minval=-scale, maxval=scale)
        b = jax.random.uniform(keys[2 * i + 1], (cout,), jnp.float32,
                               minval=-scale, maxval=scale)
        params.append((w, b))
    return params


def _reference(x_nchw, params):
    """Pure-JAX reference matching the PyTorch forward."""
    x = x_nchw.reshape(x_nchw.shape[0], 10)
    (w1, b1), (w2, b2), (w3, b3), (wf, bf) = params
    h = jnp.maximum(x @ w1.T + b1, 0.0)
    h = jnp.maximum(h @ w2.T + b2, 0.0)
    h = jnp.maximum(h @ w3.T + b3, 0.0)
    return h @ wf.T + bf


if __name__ == "__main__":
    key = jax.random.PRNGKey(0)
    k_x, k_p, k_x2 = jax.random.split(key, 3)

    params = init_params(k_p)

    # Small shape consistent with the module: batch=2, 10 channels, 1x1 spatial.
    B = 2
    x = jax.random.normal(k_x, (B, 10, 1, 1), jnp.float32)
    out = jax.block_until_ready(pt1d_conv_branch(x, params))
    ref = _reference(x, params)
    assert out.shape == (B, 64)
    assert jnp.allclose(out, ref, atol=1e-5, rtol=1e-5), "mismatch vs reference (B=2)"

    # Second check: non-multiple batch with a multi-step grid (padding + pipelining).
    B2 = 300
    x2 = jax.random.normal(k_x2, (B2, 10, 1, 1), jnp.float32)
    out2 = jax.block_until_ready(pt1d_conv_branch(x2, params, tile_b=128))
    ref2 = _reference(x2, params)
    assert out2.shape == (B2, 64)
    assert jnp.allclose(out2, ref2, atol=1e-5, rtol=1e-5), "mismatch vs reference (B=300)"

    print("KERNEL_OK")
</pallas_src>

<mosaic_0001>
module attributes {stable_mosaic.version = 11 : i64} {
  func.func @_mlp_kernel(%arg0: i32, %arg1: memref<128x10xf32, #tpu.memory_space<vmem>>, %arg2: memref<10x32xf32, #tpu.memory_space<vmem>>, %arg3: memref<1x32xf32, #tpu.memory_space<vmem>>, %arg4: memref<32x16xf32, #tpu.memory_space<vmem>>, %arg5: memref<1x16xf32, #tpu.memory_space<vmem>>, %arg6: memref<16x8xf32, #tpu.memory_space<vmem>>, %arg7: memref<1x8xf32, #tpu.memory_space<vmem>>, %arg8: memref<8x64xf32, #tpu.memory_space<vmem>>, %arg9: memref<1x64xf32, #tpu.memory_space<vmem>>, %arg10: memref<128x64xf32, #tpu.memory_space<vmem>>) attributes {dimension_semantics = [#tpu.dimension_semantics<parallel>], iteration_bounds = array<i64: 1>, scalar_prefetch = 0 : i64, scratch_operands = 0 : i64, tpu.core_type = #tpu.core_type<tc>, window_params = [{transform_indices = @transform_0, window_bounds = array<i64: 128, 10>}, {pipeline_mode = #tpu.pipeline_mode<synchronous>, transform_indices = @transform_1, window_bounds = array<i64: 10, 32>}, {pipeline_mode = #tpu.pipeline_mode<synchronous>, transform_indices = @transform_2, window_bounds = array<i64: 1, 32>}, {pipeline_mode = #tpu.pipeline_mode<synchronous>, transform_indices = @transform_3, window_bounds = array<i64: 32, 16>}, {pipeline_mode = #tpu.pipeline_mode<synchronous>, transform_indices = @transform_4, window_bounds = array<i64: 1, 16>}, {pipeline_mode = #tpu.pipeline_mode<synchronous>, transform_indices = @transform_5, window_bounds = array<i64: 16, 8>}, {pipeline_mode = #tpu.pipeline_mode<synchronous>, transform_indices = @transform_6, window_bounds = array<i64: 1, 8>}, {pipeline_mode = #tpu.pipeline_mode<synchronous>, transform_indices = @transform_7, window_bounds = array<i64: 8, 64>}, {pipeline_mode = #tpu.pipeline_mode<synchronous>, transform_indices = @transform_8, window_bounds = array<i64: 1, 64>}, {transform_indices = @transform_9, window_bounds = array<i64: 128, 64>}]} {
    %c0 = arith.constant 0 : index
    %c0_0 = arith.constant 0 : index
    %0 = vector.load %arg1[%c0, %c0_0] : memref<128x10xf32, #tpu.memory_space<vmem>>, vector<128x10xf32>
    %c0_1 = arith.constant 0 : index
    %c0_2 = arith.constant 0 : index
    %1 = vector.load %arg2[%c0_1, %c0_2] : memref<10x32xf32, #tpu.memory_space<vmem>>, vector<10x32xf32>
    %cst = arith.constant dense<0.000000e+00> : vector<128x32xf32>
    %2 = tpu.matmul %0, %1, %cst {dimension_numbers = #tpu.dot_dimension_numbers<[1], [0], [0], [1], [0, 0, 1, 1], [], []>} : vector<128x10xf32>, vector<10x32xf32>, vector<128x32xf32> -> vector<128x32xf32>
    %c0_3 = arith.constant 0 : index
    %c0_4 = arith.constant 0 : index
    %3 = vector.load %arg3[%c0_3, %c0_4] : memref<1x32xf32, #tpu.memory_space<vmem>>, vector<1x32xf32>
    %4 = vector.broadcast %3 : vector<1x32xf32> to vector<128x32xf32>
    %5 = arith.addf %2, %4 : vector<128x32xf32>
    %cst_5 = arith.constant 0.000000e+00 : f32
    %6 = vector.broadcast %cst_5 : f32 to vector<128x32xf32>
    %7 = arith.maximumf %5, %6 : vector<128x32xf32>
    %c0_6 = arith.constant 0 : index
    %c0_7 = arith.constant 0 : index
    %8 = vector.load %arg4[%c0_6, %c0_7] : memref<32x16xf32, #tpu.memory_space<vmem>>, vector<32x16xf32>
    %cst_8 = arith.constant dense<0.000000e+00> : vector<128x16xf32>
    %9 = tpu.matmul %7, %8, %cst_8 {dimension_numbers = #tpu.dot_dimension_numbers<[1], [0], [0], [1], [0, 0, 1, 1], [], []>} : vector<128x32xf32>, vector<32x16xf32>, vector<128x16xf32> -> vector<128x16xf32>
    %c0_9 = arith.constant 0 : index
    %c0_10 = arith.constant 0 : index
    %10 = vector.load %arg5[%c0_9, %c0_10] : memref<1x16xf32, #tpu.memory_space<vmem>>, vector<1x16xf32>
    %11 = vector.broadcast %10 : vector<1x16xf32> to vector<128x16xf32>
    %12 = arith.addf %9, %11 : vector<128x16xf32>
    %cst_11 = arith.constant 0.000000e+00 : f32
    %13 = vector.broadcast %cst_11 : f32 to vector<128x16xf32>
    %14 = arith.maximumf %12, %13 : vector<128x16xf32>
    %c0_12 = arith.constant 0 : index
    %c0_13 = arith.constant 0 : index
    %15 = vector.load %arg6[%c0_12, %c0_13] : memref<16x8xf32, #tpu.memory_space<vmem>>, vector<16x8xf32>
    %cst_14 = arith.constant dense<0.000000e+00> : vector<128x8xf32>
    %16 = tpu.matmul %14, %15, %cst_14 {dimension_numbers = #tpu.dot_dimension_numbers<[1], [0], [0], [1], [0, 0, 1, 1], [], []>} : vector<128x16xf32>, vector<16x8xf32>, vector<128x8xf32> -> vector<128x8xf32>
    %c0_15 = arith.constant 0 : index
    %c0_16 = arith.constant 0 : index
    %17 = vector.load %arg7[%c0_15, %c0_16] : memref<1x8xf32, #tpu.memory_space<vmem>>, vector<1x8xf32>
    %18 = vector.broadcast %17 : vector<1x8xf32> to vector<128x8xf32>
    %19 = arith.addf %16, %18 : vector<128x8xf32>
    %cst_17 = arith.constant 0.000000e+00 : f32
    %20 = vector.broadcast %cst_17 : f32 to vector<128x8xf32>
    %21 = arith.maximumf %19, %20 : vector<128x8xf32>
    %c0_18 = arith.constant 0 : index
    %c0_19 = arith.constant 0 : index
    %22 = vector.load %arg8[%c0_18, %c0_19] : memref<8x64xf32, #tpu.memory_space<vmem>>, vector<8x64xf32>
    %cst_20 = arith.constant dense<0.000000e+00> : vector<128x64xf32>
    %23 = tpu.matmul %21, %22, %cst_20 {dimension_numbers = #tpu.dot_dimension_numbers<[1], [0], [0], [1], [0, 0, 1, 1], [], []>} : vector<128x8xf32>, vector<8x64xf32>, vector<128x64xf32> -> vector<128x64xf32>
    %c0_21 = arith.constant 0 : index
    %c0_22 = arith.constant 0 : index
    %24 = vector.load %arg9[%c0_21, %c0_22] : memref<1x64xf32, #tpu.memory_space<vmem>>, vector<1x64xf32>
    %25 = vector.broadcast %24 : vector<1x64xf32> to vector<128x64xf32>
    %26 = arith.addf %23, %25 : vector<128x64xf32>
    %c0_23 = arith.constant 0 : index
    %c0_24 = arith.constant 0 : index
    %27 = vector.load %arg10[%c0_23, %c0_24] : memref<128x64xf32, #tpu.memory_space<vmem>>, vector<128x64xf32>
    tpu.vector_store %arg10[%c0_23, %c0_24], %26 {strides = array<i32>} : memref<128x64xf32, #tpu.memory_space<vmem>>, vector<128x64xf32>,
    return
  }
  func.func @transform_0(%arg0: i32) -> (i32, i32) {
    %c0_i32 = arith.constant 0 : i32
    %c0_i32_0 = arith.constant 0 : i32
    return %arg0, %c0_i32 : i32, i32
  }
  func.func @transform_1(%arg0: i32) -> (i32, i32) {
    %c0_i32 = arith.constant 0 : i32
    %c0_i32_0 = arith.constant 0 : i32
    %c0_i32_1 = arith.constant 0 : i32
    return %c0_i32, %c0_i32_0 : i32, i32
  }
  func.func @transform_2(%arg0: i32) -> (i32, i32) {
    %c0_i32 = arith.constant 0 : i32
    %c0_i32_0 = arith.constant 0 : i32
    %c0_i32_1 = arith.constant 0 : i32
    return %c0_i32, %c0_i32_0 : i32, i32
  }
  func.func @transform_3(%arg0: i32) -> (i32, i32) {
    %c0_i32 = arith.constant 0 : i32
    %c0_i32_0 = arith.constant 0 : i32
    %c0_i32_1 = arith.constant 0 : i32
    return %c0_i32, %c0_i32_0 : i32, i32
  }
  func.func @transform_4(%arg0: i32) -> (i32, i32) {
    %c0_i32 = arith.constant 0 : i32
    %c0_i32_0 = arith.constant 0 : i32
    %c0_i32_1 = arith.constant 0 : i32
    return %c0_i32, %c0_i32_0 : i32, i32
  }
  func.func @transform_5(%arg0: i32) -> (i32, i32) {
    %c0_i32 = arith.constant 0 : i32
    %c0_i32_0 = arith.constant 0 : i32
    %c0_i32_1 = arith.constant 0 : i32
    return %c0_i32, %c0_i32_0 : i32, i32
  }
  func.func @transform_6(%arg0: i32) -> (i32, i32) {
    %c0_i32 = arith.constant 0 : i32
    %c0_i32_0 = arith.constant 0 : i32
    %c0_i32_1 = arith.constant 0 : i32
    return %c0_i32, %c0_i32_0 : i32, i32
  }
  func.func @transform_7(%arg0: i32) -> (i32, i32) {
    %c0_i32 = arith.constant 0 : i32
    %c0_i32_0 = arith.constant 0 : i32
    %c0_i32_1 = arith.constant 0 : i32
    return %c0_i32, %c0_i32_0 : i32, i32
  }
  func.func @transform_8(%arg0: i32) -> (i32, i32) {
    %c0_i32 = arith.constant 0 : i32
    %c0_i32_0 = arith.constant 0 : i32
    %c0_i32_1 = arith.constant 0 : i32
    return %c0_i32, %c0_i32_0 : i32, i32
  }
  func.func @transform_9(%arg0: i32) -> (i32, i32) {
    %c0_i32 = arith.constant 0 : i32
    %c0_i32_0 = arith.constant 0 : i32
    return %arg0, %c0_i32 : i32, i32
  }
}

</mosaic_0001>

<llo_original>
// kernel: tpu_custom_call.1
$region0: #{tpu_custom_call.1}
  #allocation0 [shape = 'u32[]', space=smem, size = 0x4, offset = 0x4, fixed_abs, tag = 'smem constant byte address 0x4 - core index']
  #allocation1 [shape = 'u32[144,128]{1,0:T(1,128)}', space=vmem, size = 0x12000, scoped, tag = 'internal scratch']
  %s0 = inlined_call_operand.vmem [shape: f32[128,10], index: 0, kind: input, shape index: {}]
  %s1 = inlined_call_operand.vmem [shape: f32[10,32], index: 1, kind: input, shape index: {}]
  %s2 = inlined_call_operand.vmem [shape: f32[1,32], index: 2, kind: input, shape index: {}]
  %s3 = inlined_call_operand.vmem [shape: f32[32,16], index: 3, kind: input, shape index: {}]
  %s4 = inlined_call_operand.vmem [shape: f32[1,16], index: 4, kind: input, shape index: {}]
  %s5 = inlined_call_operand.vmem [shape: f32[16,8], index: 5, kind: input, shape index: {}]
  %s6 = inlined_call_operand.vmem [shape: f32[1,8], index: 6, kind: input, shape index: {}]
  %s7 = inlined_call_operand.vmem [shape: f32[8,64], index: 7, kind: input, shape index: {}]
  %s8 = inlined_call_operand.vmem [shape: f32[1,64], index: 8, kind: input, shape index: {}]
  %s9 = inlined_call_operand.vmem [shape: f32[128,64], index: 9, kind: output, shape index: {}]
  %s10 = sld [smem:[#allocation0]]
  $region46: #{tpu_custom_call.1} parent=0
    _
  %s12 = ssub.s32 1, %s10
  %s13 = scalar_select 0, %s12, %s10
  // Predicated region
  $region2: #{tpu_custom_call.1} parent=0 // pred_check
    _
  $region3: #{tpu_custom_call.1} parent=0 // pred_check_branch
    %15 = sbr.rel (0) target = $region5
  $region4: #{tpu_custom_call.1} parent=0 // pred_region
    _
  $region5: #{tpu_custom_call.1} parent=0 // pred_fallthru
    _
  // Predicated region
  $region6: #{tpu_custom_call.1} parent=0 // pred_check
    _
  $region7: #{tpu_custom_call.1} parent=0 // pred_check_branch
    %17 = sbr.rel (0) target = $region9
  $region8: #{tpu_custom_call.1} parent=0 // pred_region
    _
  $region9: #{tpu_custom_call.1} parent=0 // pred_fallthru
    _
  // Predicated region
  $region10: #{tpu_custom_call.1} parent=0 // pred_check
    _
  $region11: #{tpu_custom_call.1} parent=0 // pred_check_branch
    %19 = sbr.rel (0) target = $region13
  $region12: #{tpu_custom_call.1} parent=0 // pred_region
    _
  $region13: #{tpu_custom_call.1} parent=0 // pred_fallthru
    _
  // Predicated region
  $region14: #{tpu_custom_call.1} parent=0 // pred_check
    _
  $region15: #{tpu_custom_call.1} parent=0 // pred_check_branch
    %21 = sbr.rel (0) target = $region17
  $region16: #{tpu_custom_call.1} parent=0 // pred_region
    _
  $region17: #{tpu_custom_call.1} parent=0 // pred_fallthru
    _
  // Predicated region
  $region18: #{tpu_custom_call.1} parent=0 // pred_check
    _
  $region19: #{tpu_custom_call.1} parent=0 // pred_check_branch
    %23 = sbr.rel (0) target = $region21
  $region20: #{tpu_custom_call.1} parent=0 // pred_region
    _
  $region21: #{tpu_custom_call.1} parent=0 // pred_fallthru
    _
  // Predicated region
  $region22: #{tpu_custom_call.1} parent=0 // pred_check
    _
  $region23: #{tpu_custom_call.1} parent=0 // pred_check_branch
    %25 = sbr.rel (0) target = $region25
  $region24: #{tpu_custom_call.1} parent=0 // pred_region
    _
  $region25: #{tpu_custom_call.1} parent=0 // pred_fallthru
    _
  // Predicated region
  $region26: #{tpu_custom_call.1} parent=0 // pred_check
    _
  $region27: #{tpu_custom_call.1} parent=0 // pred_check_branch
    %27 = sbr.rel (0) target = $region29
  $region28: #{tpu_custom_call.1} parent=0 // pred_region
    _
  $region29: #{tpu_custom_call.1} parent=0 // pred_fallthru
    _
  // Predicated region
  $region30: #{tpu_custom_call.1} parent=0 // pred_check
    _
  $region31: #{tpu_custom_call.1} parent=0 // pred_check_branch
    %29 = sbr.rel (0) target = $region33
  $region32: #{tpu_custom_call.1} parent=0 // pred_region
    _
  $region33: #{tpu_custom_call.1} parent=0 // pred_fallthru
    _
  // Predicated region
  $region34: #{tpu_custom_call.1} parent=0 // pred_check
    _
  $region35: #{tpu_custom_call.1} parent=0 // pred_check_branch
    %31 = sbr.rel (0) target = $region37
  $region36: #{tpu_custom_call.1} parent=0 // pred_region
    _
  $region37: #{tpu_custom_call.1} parent=0 // pred_fallthru
    _
  %v32 = vld [vmem:[%s0] sm:$0xff]
  %v33 = vld [vmem:[%s0 + $0x8] sm:$0xff]
  %v34 = vld [vmem:[%s0 + $0x10] sm:$0xff]
  %v35 = vld [vmem:[%s0 + $0x18] sm:$0xff]
  %v36 = vld [vmem:[%s0 + $0x20] sm:$0xff]
  %v37 = vld [vmem:[%s0 + $0x28] sm:$0xff]
  %v38 = vld [vmem:[%s0 + $0x30] sm:$0xff]
  %v39 = vld [vmem:[%s0 + $0x38] sm:$0xff]
  %v40 = vld [vmem:[%s0 + $0x40] sm:$0xff]
  %v41 = vld [vmem:[%s0 + $0x48] sm:$0xff]
  %v42 = vld [vmem:[%s0 + $0x50] sm:$0xff]
  %v43 = vld [vmem:[%s0 + $0x58] sm:$0xff]
  %v44 = vld [vmem:[%s0 + $0x60] sm:$0xff]
  %v45 = vld [vmem:[%s0 + $0x68] sm:$0xff]
  %v46 = vld [vmem:[%s0 + $0x70] sm:$0xff]
  %v47 = vld [vmem:[%s0 + $0x78] sm:$0xff]
  %v48 = vld [vmem:[%s1] sm:$0xff]
  %v49 = vld [vmem:[%s1 + $0x8] sm:$0x3]
  %v50 = vld [vmem:[%s2] sm:$0x1]
  %v52 = vlaneseq
  %v53 = vshrl.u32 %v52, 7
  %v54 = vsub.s32 0, %v53
  %v55 = vrot.slane %v50, %v54
  %vm57 = vcmask 80896
  %v59 = vsel %vm57, %v32, 0
  %v62 = vsel %vm57, %v33, 0
  %v65 = vsel %vm57, %v34, 0
  %v68 = vsel %vm57, %v35, 0
  %v71 = vsel %vm57, %v36, 0
  %v74 = vsel %vm57, %v37, 0
  %v77 = vsel %vm57, %v38, 0
  %v80 = vsel %vm57, %v39, 0
  %v83 = vsel %vm57, %v40, 0
  %v86 = vsel %vm57, %v41, 0
  %v89 = vsel %vm57, %v42, 0
  %v92 = vsel %vm57, %v43, 0
  %v95 = vsel %vm57, %v44, 0
  %v98 = vsel %vm57, %v45, 0
  %v101 = vsel %vm57, %v46, 0
  %v104 = vsel %vm57, %v47, 0
  %vm106 = vcmask 1041408
  %v108 = vsel %vm106, %v49, 0
  %110 = vmatprep.subr.mxu0 0.0
  %111 = vmatpush1.msra.mxu0 %v48
  %112 = vmatprep.subr.mxu0 0.0
  %113 = vmatpush1.msra.mxu0 %v108
  %114 = vmatprep.subr.mxu0 0.0
  %115 = vmatpush1.msra.mxu0 0.0
  %116 = vmatprep.subr.mxu0 0.0
  %117 = vmatpush1.msra.mxu0 0.0
  %118 = vmatprep.subr.mxu0 0.0
  %119 = vmatpush1.msra.mxu0 0.0
  %120 = vmatprep.subr.mxu0 0.0
  %121 = vmatpush1.msra.mxu0 0.0
  %122 = vmatprep.subr.mxu0 0.0
  %123 = vmatpush1.msra.mxu0 0.0
  %124 = vmatprep.subr.mxu0 0.0
  %125 = vmatpush1.msra.mxu0 0.0
  %126 = vmatprep.subr.mxu0 0.0
  %127 = vmatpush1.msra.mxu0 0.0
  %128 = vmatprep.subr.mxu0 0.0
  %129 = vmatpush1.msra.mxu0 0.0
  %130 = vmatprep.subr.mxu0 0.0
  %131 = vmatpush1.msra.mxu0 0.0
  %132 = vmatprep.subr.mxu0 0.0
  %133 = vmatpush1.msra.mxu0 0.0
  %134 = vmatprep.subr.mxu0 0.0
  %135 = vmatpush1.msra.mxu0 0.0
  %136 = vmatprep.subr.mxu0 0.0
  %137 = vmatpush1.msra.mxu0 0.0
  %138 = vmatprep.subr.mxu0 0.0
  %139 = vmatpush1.msra.mxu0 0.0
  %140 = vmatprep.subr.mxu0 0.0
  %141 = vmatpush1.msra.mxu0 0.0
  %142 = vmatprep.subr.mxu0 0.0
  %143 = vmatpush1.msra.mxu0 0.0
  %144 = vmatprep.subr.mxu0 0.0
  %145 = vmatpush1.msra.mxu0 0.0
  %146 = vmatprep.subr.mxu0 0.0
  %147 = vmatpush1.msra.mxu0 0.0
  %148 = vmatprep.subr.mxu0 0.0
  %149 = vmatpush1.msra.mxu0 0.0
  %150 = vmatprep.subr.mxu0 0.0
  %151 = vmatpush1.msra.mxu0 0.0
  %152 = vmatprep.subr.mxu0 0.0
  %153 = vmatpush1.msra.mxu0 0.0
  %154 = vmatprep.subr.mxu0 0.0
  %155 = vmatpush1.msra.mxu0 0.0
  %156 = vmatprep.subr.mxu0 0.0
  %157 = vmatpush1.msra.mxu0 0.0
  %158 = vmatprep.subr.mxu0 0.0
  %159 = vmatpush1.msra.mxu0 0.0
  %160 = vmatprep.subr.mxu0 0.0
  %161 = vmatpush1.msra.mxu0 0.0
  %162 = vmatprep.subr.mxu0 0.0
  %163 = vmatpush1.msra.mxu0 0.0
  %164 = vmatprep.subr.mxu0 0.0
  %165 = vmatpush1.msra.mxu0 0.0
  %166 = vmatprep.subr.mxu0 0.0
  %167 = vmatpush1.msra.mxu0 0.0
  %168 = vmatprep.subr.mxu0 0.0
  %169 = vmatpush1.msra.mxu0 0.0
  %170 = vmatprep.subr.mxu0 0.0
  %171 = vmatpush1.msra.mxu0 0.0
  %172 = vmatprep.subr.mxu0 0.0
  %173 = vmatpush1.msra.mxu0 0.0
  %174 = vmatprep.mubr.f32.mxu0 0.0
  %175 = vmatmul.mubr.f32.gmra.mrb[0].mxu0 %v59
  %v176 = vpop.f32.mrb[0].mxu0
  %v177 = vadd.f32 %v55, %v176
  %v178 = vpop.f32.mrb[0].mxu0
  %179 = vmatprep.mubr.f32.mxu0 0.0
  %180 = vmatmul.mubr.f32.gmra.mrb[0].mxu0 %v62
  %v181 = vpop.f32.mrb[0].mxu0
  %v182 = vadd.f32 %v55, %v181
  %v183 = vpop.f32.mrb[0].mxu0
  %184 = vmatprep.mubr.f32.mxu0 0.0
  %185 = vmatmul.mubr.f32.gmra.mrb[0].mxu0 %v65
  %v186 = vpop.f32.mrb[0].mxu0
  %v187 = vadd.f32 %v55, %v186
  %v188 = vpop.f32.mrb[0].mxu0
  %189 = vmatprep.mubr.f32.mxu0 0.0
  %190 = vmatmul.mubr.f32.gmra.mrb[0].mxu0 %v68
  %v191 = vpop.f32.mrb[0].mxu0
  %v192 = vadd.f32 %v55, %v191
  %v193 = vpop.f32.mrb[0].mxu0
  %194 = vmatprep.mubr.f32.mxu0 0.0
  %195 = vmatmul.mubr.f32.gmra.mrb[0].mxu0 %v71
  %v196 = vpop.f32.mrb[0].mxu0
  %v197 = vadd.f32 %v55, %v196
  %v198 = vpop.f32.mrb[0].mxu0
  %199 = vmatprep.mubr.f32.mxu0 0.0
  %200 = vmatmul.mubr.f32.gmra.mrb[0].mxu0 %v74
  %v201 = vpop.f32.mrb[0].mxu0
  %v202 = vadd.f32 %v55, %v201
  %v203 = vpop.f32.mrb[0].mxu0
  %204 = vmatprep.mubr.f32.mxu0 0.0
  %205 = vmatmul.mubr.f32.gmra.mrb[0].mxu0 %v77
  %v206 = vpop.f32.mrb[0].mxu0
  %v207 = vadd.f32 %v55, %v206
  %v208 = vpop.f32.mrb[0].mxu0
  %209 = vmatprep.mubr.f32.mxu0 0.0
  %210 = vmatmul.mubr.f32.gmra.mrb[0].mxu0 %v80
  %v211 = vpop.f32.mrb[0].mxu0
  %v212 = vadd.f32 %v55, %v211
  %v213 = vpop.f32.mrb[0].mxu0
  %214 = vmatprep.mubr.f32.mxu0 0.0
  %215 = vmatmul.mubr.f32.gmra.mrb[0].mxu0 %v83
  %v216 = vpop.f32.mrb[0].mxu0
  %v217 = vadd.f32 %v55, %v216
  %v218 = vpop.f32.mrb[0].mxu0
  %219 = vmatprep.mubr.f32.mxu0 0.0
  %220 = vmatmul.mubr.f32.gmra.mrb[0].mxu0 %v86
  %v221 = vpop.f32.mrb[0].mxu0
  %v222 = vadd.f32 %v55, %v221
  %v223 = vpop.f32.mrb[0].mxu0
  %224 = vmatprep.mubr.f32.mxu0 0.0
  %225 = vmatmul.mubr.f32.gmra.mrb[0].mxu0 %v89
  %v226 = vpop.f32.mrb[0].mxu0
  %v227 = vadd.f32 %v55, %v226
  %v228 = vpop.f32.mrb[0].mxu0
  %229 = vmatprep.mubr.f32.mxu0 0.0
  %230 = vmatmul.mubr.f32.gmra.mrb[0].mxu0 %v92
  %v231 = vpop.f32.mrb[0].mxu0
  %v232 = vadd.f32 %v55, %v231
  %v233 = vpop.f32.mrb[0].mxu0
  %234 = vmatprep.mubr.f32.mxu0 0.0
  %235 = vmatmul.mubr.f32.gmra.mrb[0].mxu0 %v95
  %v236 = vpop.f32.mrb[0].mxu0
  %v237 = vadd.f32 %v55, %v236
  %v238 = vpop.f32.mrb[0].mxu0
  %239 = vmatprep.mubr.f32.mxu0 0.0
  %240 = vmatmul.mubr.f32.gmra.mrb[0].mxu0 %v98
  %v241 = vpop.f32.mrb[0].mxu0
  %v242 = vadd.f32 %v55, %v241
  %v243 = vpop.f32.mrb[0].mxu0
  %244 = vmatprep.mubr.f32.mxu0 0.0
  %245 = vmatmul.mubr.f32.gmra.mrb[0].mxu0 %v101
  %v246 = vpop.f32.mrb[0].mxu0
  %v247 = vadd.f32 %v55, %v246
  %v248 = vpop.f32.mrb[0].mxu0
  %249 = vmatprep.mubr.f32.mxu0 0.0
  %250 = vmatmul.mubr.f32.gmra.mrb[0].mxu0 %v104
  %v251 = vpop.f32.mrb[0].mxu0
  %v252 = vadd.f32 %v55, %v251
  %v253 = vpop.f32.mrb[0].mxu0
  %254 = vdwg.mxu0
  %v255 = vmax.f32 %v177, 0.0
  %v256 = vmax.f32 %v182, 0.0
  %v257 = vmax.f32 %v187, 0.0
  %v258 = vmax.f32 %v192, 0.0
  %v259 = vmax.f32 %v197, 0.0
  %v260 = vmax.f32 %v202, 0.0
  %v261 = vmax.f32 %v207, 0.0
  %v262 = vmax.f32 %v212, 0.0
  %v263 = vmax.f32 %v217, 0.0
  %v264 = vmax.f32 %v222, 0.0
  %v265 = vmax.f32 %v227, 0.0
  %v266 = vmax.f32 %v232, 0.0
  %v267 = vmax.f32 %v237, 0.0
  %v268 = vmax.f32 %v242, 0.0
  %v269 = vmax.f32 %v247, 0.0
  %v270 = vmax.f32 %v252, 0.0
  %v271 = vld [vmem:[%s3] sm:$0xff]
  %v272 = vld [vmem:[%s3 + $0x8] sm:$0xff]
  %v273 = vld [vmem:[%s3 + $0x10] sm:$0xff]
  %v274 = vld [vmem:[%s3 + $0x18] sm:$0xff]
  %v275 = vld [vmem:[%s4] sm:$0x1]
  %v277 = vlaneseq
  %v278 = vshrl.u32 %v277, 7
  %v279 = vsub.s32 0, %v278
  %v280 = vrot.slane %v275, %v279
  %vm282 = vcmask 261120
  %v284 = vsel %vm282, %v255, 0
  %v287 = vsel %vm282, %v256, 0
  %v290 = vsel %vm282, %v257, 0
  %v293 = vsel %vm282, %v258, 0
  %v296 = vsel %vm282, %v259, 0
  %v299 = vsel %vm282, %v260, 0
  %v302 = vsel %vm282, %v261, 0
  %v305 = vsel %vm282, %v262, 0
  %v308 = vsel %vm282, %v263, 0
  %v311 = vsel %vm282, %v264, 0
  %v314 = vsel %vm282, %v265, 0
  %v317 = vsel %vm282, %v266, 0
  %v320 = vsel %vm282, %v267, 0
  %v323 = vsel %vm282, %v268, 0
  %v326 = vsel %vm282, %v269, 0
  %v329 = vsel %vm282, %v270, 0
  %331 = vmatprep.subr.mxu0 0.0
  %332 = vmatpush1.msra.mxu0 %v271
  %333 = vmatprep.subr.mxu0 0.0
  %334 = vmatpush1.msra.mxu0 %v272
  %335 = vmatprep.subr.mxu0 0.0
  %336 = vmatpush1.msra.mxu0 %v273
  %337 = vmatprep.subr.mxu0 0.0
  %338 = vmatpush1.msra.mxu0 %v274
  %339 = vmatprep.subr.mxu0 0.0
  %340 = vmatpush1.msra.mxu0 0.0
  %341 = vmatprep.subr.mxu0 0.0
  %342 = vmatpush1.msra.mxu0 0.0
  %343 = vmatprep.subr.mxu0 0.0
  %344 = vmatpush1.msra.mxu0 0.0
  %345 = vmatprep.subr.mxu0 0.0
  %346 = vmatpush1.msra.mxu0 0.0
  %347 = vmatprep.subr.mxu0 0.0
  %348 = vmatpush1.msra.mxu0 0.0
  %349 = vmatprep.subr.mxu0 0.0
  %350 = vmatpush1.msra.mxu0 0.0
  %351 = vmatprep.subr.mxu0 0.0
  %352 = vmatpush1.msra.mxu0 0.0
  %353 = vmatprep.subr.mxu0 0.0
  %354 = vmatpush1.msra.mxu0 0.0
  %355 = vmatprep.subr.mxu0 0.0
  %356 = vmatpush1.msra.mxu0 0.0
  %357 = vmatprep.subr.mxu0 0.0
  %358 = vmatpush1.msra.mxu0 0.0
  %359 = vmatprep.subr.mxu0 0.0
  %360 = vmatpush1.msra.mxu0 0.0
  %361 = vmatprep.subr.mxu0 0.0
  %362 = vmatpush1.msra.mxu0 0.0
  %363 = vmatprep.subr.mxu0 0.0
  %364 = vmatpush1.msra.mxu0 0.0
  %365 = vmatprep.subr.mxu0 0.0
  %366 = vmatpush1.msra.mxu0 0.0
  %367 = vmatprep.subr.mxu0 0.0
  %368 = vmatpush1.msra.mxu0 0.0
  %369 = vmatprep.subr.mxu0 0.0
  %370 = vmatpush1.msra.mxu0 0.0
  %371 = vmatprep.subr.mxu0 0.0
  %372 = vmatpush1.msra.mxu0 0.0
  %373 = vmatprep.subr.mxu0 0.0
  %374 = vmatpush1.msra.mxu0 0.0
  %375 = vmatprep.subr.mxu0 0.0
  %376 = vmatpush1.msra.mxu0 0.0
  %377 = vmatprep.subr.mxu0 0.0
  %378 = vmatpush1.msra.mxu0 0.0
  %379 = vmatprep.subr.mxu0 0.0
  %380 = vmatpush1.msra.mxu0 0.0
  %381 = vmatprep.subr.mxu0 0.0
  %382 = vmatpush1.msra.mxu0 0.0
  %383 = vmatprep.subr.mxu0 0.0
  %384 = vmatpush1.msra.mxu0 0.0
  %385 = vmatprep.subr.mxu0 0.0
  %386 = vmatpush1.msra.mxu0 0.0
  %387 = vmatprep.subr.mxu0 0.0
  %388 = vmatpush1.msra.mxu0 0.0
  %389 = vmatprep.subr.mxu0 0.0
  %390 = vmatpush1.msra.mxu0 0.0
  %391 = vmatprep.subr.mxu0 0.0
  %392 = vmatpush1.msra.mxu0 0.0
  %393 = vmatprep.subr.mxu0 0.0
  %394 = vmatpush1.msra.mxu0 0.0
  %395 = vmatprep.mubr.f32.mxu0 0.0
  %396 = vmatmul.mubr.f32.gmra.mrb[0].mxu0 %v284
  %v397 = vpop.f32.mrb[0].mxu0
  %v398 = vadd.f32 %v280, %v397
  %v399 = vpop.f32.mrb[0].mxu0
  %400 = vmatprep.mubr.f32.mxu0 0.0
  %401 = vmatmul.mubr.f32.gmra.mrb[0].mxu0 %v287
  %v402 = vpop.f32.mrb[0].mxu0
  %v403 = vadd.f32 %v280, %v402
  %v404 = vpop.f32.mrb[0].mxu0
  %405 = vmatprep.mubr.f32.mxu0 0.0
  %406 = vmatmul.mubr.f32.gmra.mrb[0].mxu0 %v290
  %v407 = vpop.f32.mrb[0].mxu0
  %v408 = vadd.f32 %v280, %v407
  %v409 = vpop.f32.mrb[0].mxu0
  %410 = vmatprep.mubr.f32.mxu0 0.0
  %411 = vmatmul.mubr.f32.gmra.mrb[0].mxu0 %v293
  %v412 = vpop.f32.mrb[0].mxu0
  %v413 = vadd.f32 %v280, %v412
  %v414 = vpop.f32.mrb[0].mxu0
  %415 = vmatprep.mubr.f32.mxu0 0.0
  %416 = vmatmul.mubr.f32.gmra.mrb[0].mxu0 %v296
  %v417 = vpop.f32.mrb[0].mxu0
  %v418 = vadd.f32 %v280, %v417
  %v419 = vpop.f32.mrb[0].mxu0
  %420 = vmatprep.mubr.f32.mxu0 0.0
  %421 = vmatmul.mubr.f32.gmra.mrb[0].mxu0 %v299
  %v422 = vpop.f32.mrb[0].mxu0
  %v423 = vadd.f32 %v280, %v422
  %v424 = vpop.f32.mrb[0].mxu0
  %425 = vmatprep.mubr.f32.mxu0 0.0
  %426 = vmatmul.mubr.f32.gmra.mrb[0].mxu0 %v302
  %v427 = vpop.f32.mrb[0].mxu0
  %v428 = vadd.f32 %v280, %v427
  %v429 = vpop.f32.mrb[0].mxu0
  %430 = vmatprep.mubr.f32.mxu0 0.0
  %431 = vmatmul.mubr.f32.gmra.mrb[0].mxu0 %v305
  %v432 = vpop.f32.mrb[0].mxu0
  %v433 = vadd.f32 %v280, %v432
  %v434 = vpop.f32.mrb[0].mxu0
  %435 = vmatprep.mubr.f32.mxu0 0.0
  %436 = vmatmul.mubr.f32.gmra.mrb[0].mxu0 %v308
  %v437 = vpop.f32.mrb[0].mxu0
  %v438 = vadd.f32 %v280, %v437
  %v439 = vpop.f32.mrb[0].mxu0
  %440 = vmatprep.mubr.f32.mxu0 0.0
  %441 = vmatmul.mubr.f32.gmra.mrb[0].mxu0 %v311
  %v442 = vpop.f32.mrb[0].mxu0
  %v443 = vadd.f32 %v280, %v442
  %v444 = vpop.f32.mrb[0].mxu0
  %445 = vmatprep.mubr.f32.mxu0 0.0
  %446 = vmatmul.mubr.f32.gmra.mrb[0].mxu0 %v314
  %v447 = vpop.f32.mrb[0].mxu0
  %v448 = vadd.f32 %v280, %v447
  %v449 = vpop.f32.mrb[0].mxu0
  %450 = vmatprep.mubr.f32.mxu0 0.0
  %451 = vmatmul.mubr.f32.gmra.mrb[0].mxu0 %v317
  %v452 = vpop.f32.mrb[0].mxu0
  %v453 = vadd.f32 %v280, %v452
  %v454 = vpop.f32.mrb[0].mxu0
  %455 = vmatprep.mubr.f32.mxu0 0.0
  %456 = vmatmul.mubr.f32.gmra.mrb[0].mxu0 %v320
  %v457 = vpop.f32.mrb[0].mxu0
  %v458 = vadd.f32 %v280, %v457
  %v459 = vpop.f32.mrb[0].mxu0
  %460 = vmatprep.mubr.f32.mxu0 0.0
  %461 = vmatmul.mubr.f32.gmra.mrb[0].mxu0 %v323
  %v462 = vpop.f32.mrb[0].mxu0
  %v463 = vadd.f32 %v280, %v462
  %v464 = vpop.f32.mrb[0].mxu0
  %465 = vmatprep.mubr.f32.mxu0 0.0
  %466 = vmatmul.mubr.f32.gmra.mrb[0].mxu0 %v326
  %v467 = vpop.f32.mrb[0].mxu0
  %v468 = vadd.f32 %v280, %v467
  %v469 = vpop.f32.mrb[0].mxu0
  %470 = vmatprep.mubr.f32.mxu0 0.0
  %471 = vmatmul.mubr.f32.gmra.mrb[0].mxu0 %v329
  %v472 = vpop.f32.mrb[0].mxu0
  %v473 = vadd.f32 %v280, %v472
  %v474 = vpop.f32.mrb[0].mxu0
  %475 = vdwg.mxu0
  %v476 = vmax.f32 %v398, 0.0
  %v477 = vmax.f32 %v403, 0.0
  %v478 = vmax.f32 %v408, 0.0
  %v479 = vmax.f32 %v413, 0.0
  %v480 = vmax.f32 %v418, 0.0
  %v481 = vmax.f32 %v423, 0.0
  %v482 = vmax.f32 %v428, 0.0
  %v483 = vmax.f32 %v433, 0.0
  %v484 = vmax.f32 %v438, 0.0
  %v485 = vmax.f32 %v443, 0.0
  %v486 = vmax.f32 %v448, 0.0
  %v487 = vmax.f32 %v453, 0.0
  %v488 = vmax.f32 %v458, 0.0
  %v489 = vmax.f32 %v463, 0.0
  %v490 = vmax.f32 %v468, 0.0
  %v491 = vmax.f32 %v473, 0.0
  %v492 = vld [vmem:[%s5] sm:$0xff]
  %v493 = vld [vmem:[%s5 + $0x8] sm:$0xff]
  %v494 = vld [vmem:[%s6] sm:$0x1]
  %v496 = vlaneseq
  %v497 = vshrl.u32 %v496, 7
  %v498 = vsub.s32 0, %v497
  %v499 = vrot.slane %v494, %v498
  %vm501 = vcmask 130048
  %v503 = vsel %vm501, %v476, 0
  %v506 = vsel %vm501, %v477, 0
  %v509 = vsel %vm501, %v478, 0
  %v512 = vsel %vm501, %v479, 0
  %v515 = vsel %vm501, %v480, 0
  %v518 = vsel %vm501, %v481, 0
  %v521 = vsel %vm501, %v482, 0
  %v524 = vsel %vm501, %v483, 0
  %v527 = vsel %vm501, %v484, 0
  %v530 = vsel %vm501, %v485, 0
  %v533 = vsel %vm501, %v486, 0
  %v536 = vsel %vm501, %v487, 0
  %v539 = vsel %vm501, %v488, 0
  %v542 = vsel %vm501, %v489, 0
  %v545 = vsel %vm501, %v490, 0
  %v548 = vsel %vm501, %v491, 0
  %550 = vmatprep.subr.mxu0 0.0
  %551 = vmatpush1.msra.mxu0 %v492
  %552 = vmatprep.subr.mxu0 0.0
  %553 = vmatpush1.msra.mxu0 %v493
  %554 = vmatprep.subr.mxu0 0.0
  %555 = vmatpush1.msra.mxu0 0.0
  %556 = vmatprep.subr.mxu0 0.0
  %557 = vmatpush1.msra.mxu0 0.0
  %558 = vmatprep.subr.mxu0 0.0
  %559 = vmatpush1.msra.mxu0 0.0
  %560 = vmatprep.subr.mxu0 0.0
  %561 = vmatpush1.msra.mxu0 0.0
  %562 = vmatprep.subr.mxu0 0.0
  %563 = vmatpush1.msra.mxu0 0.0
  %564 = vmatprep.subr.mxu0 0.0
  %565 = vmatpush1.msra.mxu0 0.0
  %566 = vmatprep.subr.mxu0 0.0
  %567 = vmatpush1.msra.mxu0 0.0
  %568 = vmatprep.subr.mxu0 0.0
  %569 = vmatpush1.msra.mxu0 0.0
  %570 = vmatprep.subr.mxu0 0.0
  %571 = vmatpush1.msra.mxu0 0.0
  %572 = vmatprep.subr.mxu0 0.0
  %573 = vmatpush1.msra.mxu0 0.0
  %574 = vmatprep.subr.mxu0 0.0
  %575 = vmatpush1.msra.mxu0 0.0
  %576 = vmatprep.subr.mxu0 0.0
  %577 = vmatpush1.msra.mxu0 0.0
  %578 = vmatprep.subr.mxu0 0.0
  %579 = vmatpush1.msra.mxu0 0.0
  %580 = vmatprep.subr.mxu0 0.0
  %581 = vmatpush1.msra.mxu0 0.0
  %582 = vmatprep.subr.mxu0 0.0
  %583 = vmatpush1.msra.mxu0 0.0
  %584 = vmatprep.subr.mxu0 0.0
  %585 = vmatpush1.msra.mxu0 0.0
  %586 = vmatprep.subr.mxu0 0.0
  %587 = vmatpush1.msra.mxu0 0.0
  %588 = vmatprep.subr.mxu0 0.0
  %589 = vmatpush1.msra.mxu0 0.0
  %590 = vmatprep.subr.mxu0 0.0
  %591 = vmatpush1.msra.mxu0 0.0
  %592 = vmatprep.subr.mxu0 0.0
  %593 = vmatpush1.msra.mxu0 0.0
  %594 = vmatprep.subr.mxu0 0.0
  %595 = vmatpush1.msra.mxu0 0.0
  %596 = vmatprep.subr.mxu0 0.0
  %597 = vmatpush1.msra.mxu0 0.0
  %598 = vmatprep.subr.mxu0 0.0
  %599 = vmatpush1.msra.mxu0 0.0
  %600 = vmatprep.subr.mxu0 0.0
  %601 = vmatpush1.msra.mxu0 0.0
  %602 = vmatprep.subr.mxu0 0.0
  %603 = vmatpush1.msra.mxu0 0.0
  %604 = vmatprep.subr.mxu0 0.0
  %605 = vmatpush1.msra.mxu0 0.0
  %606 = vmatprep.subr.mxu0 0.0
  %607 = vmatpush1.msra.mxu0 0.0
  %608 = vmatprep.subr.mxu0 0.0
  %609 = vmatpush1.msra.mxu0 0.0
  %610 = vmatprep.subr.mxu0 0.0
  %611 = vmatpush1.msra.mxu0 0.0
  %612 = vmatprep.subr.mxu0 0.0
  %613 = vmatpush1.msra.mxu0 0.0
  %614 = vmatprep.mubr.f32.mxu0 0.0
  %615 = vmatmul.mubr.f32.gmra.mrb[0].mxu0 %v503
  %v616 = vpop.f32.mrb[0].mxu0
  %v617 = vadd.f32 %v499, %v616
  %v618 = vpop.f32.mrb[0].mxu0
  %619 = vmatprep.mubr.f32.mxu0 0.0
  %620 = vmatmul.mubr.f32.gmra.mrb[0].mxu0 %v506
  %v621 = vpop.f32.mrb[0].mxu0
  %v622 = vadd.f32 %v499, %v621
  %v623 = vpop.f32.mrb[0].mxu0
  %624 = vmatprep.mubr.f32.mxu0 0.0
  %625 = vmatmul.mubr.f32.gmra.mrb[0].mxu0 %v509
  %v626 = vpop.f32.mrb[0].mxu0
  %v627 = vadd.f32 %v499, %v626
  %v628 = vpop.f32.mrb[0].mxu0
  %629 = vmatprep.mubr.f32.mxu0 0.0
  %630 = vmatmul.mubr.f32.gmra.mrb[0].mxu0 %v512
  %v631 = vpop.f32.mrb[0].mxu0
  %v632 = vadd.f32 %v499, %v631
  %v633 = vpop.f32.mrb[0].mxu0
  %634 = vmatprep.mubr.f32.mxu0 0.0
  %635 = vmatmul.mubr.f32.gmra.mrb[0].mxu0 %v515
  %v636 = vpop.f32.mrb[0].mxu0
  %v637 = vadd.f32 %v499, %v636
  %v638 = vpop.f32.mrb[0].mxu0
  %639 = vmatprep.mubr.f32.mxu0 0.0
  %640 = vmatmul.mubr.f32.gmra.mrb[0].mxu0 %v518
  %v641 = vpop.f32.mrb[0].mxu0
  %v642 = vadd.f32 %v499, %v641
  %v643 = vpop.f32.mrb[0].mxu0
  %644 = vmatprep.mubr.f32.mxu0 0.0
  %645 = vmatmul.mubr.f32.gmra.mrb[0].mxu0 %v521
  %v646 = vpop.f32.mrb[0].mxu0
  %v647 = vadd.f32 %v499, %v646
  %v648 = vpop.f32.mrb[0].mxu0
  %649 = vmatprep.mubr.f32.mxu0 0.0
  %650 = vmatmul.mubr.f32.gmra.mrb[0].mxu0 %v524
  %v651 = vpop.f32.mrb[0].mxu0
  %v652 = vadd.f32 %v499, %v651
  %v653 = vpop.f32.mrb[0].mxu0
  %654 = vmatprep.mubr.f32.mxu0 0.0
  %655 = vmatmul.mubr.f32.gmra.mrb[0].mxu0 %v527
  %v656 = vpop.f32.mrb[0].mxu0
  %v657 = vadd.f32 %v499, %v656
  %v658 = vpop.f32.mrb[0].mxu0
  %659 = vmatprep.mubr.f32.mxu0 0.0
  %660 = vmatmul.mubr.f32.gmra.mrb[0].mxu0 %v530
  %v661 = vpop.f32.mrb[0].mxu0
  %v662 = vadd.f32 %v499, %v661
  %v663 = vpop.f32.mrb[0].mxu0
  %664 = vmatprep.mubr.f32.mxu0 0.0
  %665 = vmatmul.mubr.f32.gmra.mrb[0].mxu0 %v533
  %v666 = vpop.f32.mrb[0].mxu0
  %v667 = vadd.f32 %v499, %v666
  %v668 = vpop.f32.mrb[0].mxu0
  %669 = vmatprep.mubr.f32.mxu0 0.0
  %670 = vmatmul.mubr.f32.gmra.mrb[0].mxu0 %v536
  %v671 = vpop.f32.mrb[0].mxu0
  %v672 = vadd.f32 %v499, %v671
  %v673 = vpop.f32.mrb[0].mxu0
  %674 = vmatprep.mubr.f32.mxu0 0.0
  %675 = vmatmul.mubr.f32.gmra.mrb[0].mxu0 %v539
  %v676 = vpop.f32.mrb[0].mxu0
  %v677 = vadd.f32 %v499, %v676
  %v678 = vpop.f32.mrb[0].mxu0
  %679 = vmatprep.mubr.f32.mxu0 0.0
  %680 = vmatmul.mubr.f32.gmra.mrb[0].mxu0 %v542
  %v681 = vpop.f32.mrb[0].mxu0
  %v682 = vadd.f32 %v499, %v681
  %v683 = vpop.f32.mrb[0].mxu0
  %684 = vmatprep.mubr.f32.mxu0 0.0
  %685 = vmatmul.mubr.f32.gmra.mrb[0].mxu0 %v545
  %v686 = vpop.f32.mrb[0].mxu0
  %v687 = vadd.f32 %v499, %v686
  %v688 = vpop.f32.mrb[0].mxu0
  %689 = vmatprep.mubr.f32.mxu0 0.0
  %690 = vmatmul.mubr.f32.gmra.mrb[0].mxu0 %v548
  %v691 = vpop.f32.mrb[0].mxu0
  %v692 = vadd.f32 %v499, %v691
  %v693 = vpop.f32.mrb[0].mxu0
  %694 = vdwg.mxu0
  %v695 = vmax.f32 %v617, 0.0
  %v696 = vmax.f32 %v622, 0.0
  %v697 = vmax.f32 %v627, 0.0
  %v698 = vmax.f32 %v632, 0.0
  %v699 = vmax.f32 %v637, 0.0
  %v700 = vmax.f32 %v642, 0.0
  %v701 = vmax.f32 %v647, 0.0
  %v702 = vmax.f32 %v652, 0.0
  %v703 = vmax.f32 %v657, 0.0
  %v704 = vmax.f32 %v662, 0.0
  %v705 = vmax.f32 %v667, 0.0
  %v706 = vmax.f32 %v672, 0.0
  %v707 = vmax.f32 %v677, 0.0
  %v708 = vmax.f32 %v682, 0.0
  %v709 = vmax.f32 %v687, 0.0
  %v710 = vmax.f32 %v692, 0.0
  %v711 = vld [vmem:[%s7] sm:$0xff]
  %v712 = vld [vmem:[%s8] sm:$0x1]
  %v714 = vlaneseq
  %v715 = vshrl.u32 %v714, 7
  %v716 = vsub.s32 0, %v715
  %v717 = vrot.slane %v712, %v716
  %vm719 = vcmask 64512
  %v721 = vsel %vm719, %v695, 0
  %v724 = vsel %vm719, %v696, 0
  %v727 = vsel %vm719, %v697, 0
  %v730 = vsel %vm719, %v698, 0
  %v733 = vsel %vm719, %v699, 0
  %v736 = vsel %vm719, %v700, 0
  %v739 = vsel %vm719, %v701, 0
  %v742 = vsel %vm719, %v702, 0
  %v745 = vsel %vm719, %v703, 0
  %v748 = vsel %vm719, %v704, 0
  %v751 = vsel %vm719, %v705, 0
  %v754 = vsel %vm719, %v706, 0
  %v757 = vsel %vm719, %v707, 0
  %v760 = vsel %vm719, %v708, 0
  %v763 = vsel %vm719, %v709, 0
  %v766 = vsel %vm719, %v710, 0
  %768 = vmatprep.subr.mxu0 0.0
  %769 = vmatpush1.msra.mxu0 %v711
  %770 = vmatprep.subr.mxu0 0.0
  %771 = vmatpush1.msra.mxu0 0.0
  %772 = vmatprep.subr.mxu0 0.0
  %773 = vmatpush1.msra.mxu0 0.0
  %774 = vmatprep.subr.mxu0 0.0
  %775 = vmatpush1.msra.mxu0 0.0
  %776 = vmatprep.subr.mxu0 0.0
  %777 = vmatpush1.msra.mxu0 0.0
  %778 = vmatprep.subr.mxu0 0.0
  %779 = vmatpush1.msra.mxu0 0.0
  %780 = vmatprep.subr.mxu0 0.0
  %781 = vmatpush1.msra.mxu0 0.0
  %782 = vmatprep.subr.mxu0 0.0
  %783 = vmatpush1.msra.mxu0 0.0
  %784 = vmatprep.subr.mxu0 0.0
  %785 = vmatpush1.msra.mxu0 0.0
  %786 = vmatprep.subr.mxu0 0.0
  %787 = vmatpush1.msra.mxu0 0.0
  %788 = vmatprep.subr.mxu0 0.0
  %789 = vmatpush1.msra.mxu0 0.0
  %790 = vmatprep.subr.mxu0 0.0
  %791 = vmatpush1.msra.mxu0 0.0
  %792 = vmatprep.subr.mxu0 0.0
  %793 = vmatpush1.msra.mxu0 0.0
  %794 = vmatprep.subr.mxu0 0.0
  %795 = vmatpush1.msra.mxu0 0.0
  %796 = vmatprep.subr.mxu0 0.0
  %797 = vmatpush1.msra.mxu0 0.0
  %798 = vmatprep.subr.mxu0 0.0
  %799 = vmatpush1.msra.mxu0 0.0
  %800 = vmatprep.subr.mxu0 0.0
  %801 = vmatpush1.msra.mxu0 0.0
  %802 = vmatprep.subr.mxu0 0.0
  %803 = vmatpush1.msra.mxu0 0.0
  %804 = vmatprep.subr.mxu0 0.0
  %805 = vmatpush1.msra.mxu0 0.0
  %806 = vmatprep.subr.mxu0 0.0
  %807 = vmatpush1.msra.mxu0 0.0
  %808 = vmatprep.subr.mxu0 0.0
  %809 = vmatpush1.msra.mxu0 0.0
  %810 = vmatprep.subr.mxu0 0.0
  %811 = vmatpush1.msra.mxu0 0.0
  %812 = vmatprep.subr.mxu0 0.0
  %813 = vmatpush1.msra.mxu0 0.0
  %814 = vmatprep.subr.mxu0 0.0
  %815 = vmatpush1.msra.mxu0 0.0
  %816 = vmatprep.subr.mxu0 0.0
  %817 = vmatpush1.msra.mxu0 0.0
  %818 = vmatprep.subr.mxu0 0.0
  %819 = vmatpush1.msra.mxu0 0.0
  %820 = vmatprep.subr.mxu0 0.0
  %821 = vmatpush1.msra.mxu0 0.0
  %822 = vmatprep.subr.mxu0 0.0
  %823 = vmatpush1.msra.mxu0 0.0
  %824 = vmatprep.subr.mxu0 0.0
  %825 = vmatpush1.msra.mxu0 0.0
  %826 = vmatprep.subr.mxu0 0.0
  %827 = vmatpush1.msra.mxu0 0.0
  %828 = vmatprep.subr.mxu0 0.0
  %829 = vmatpush1.msra.mxu0 0.0
  %830 = vmatprep.subr.mxu0 0.0
  %831 = vmatpush1.msra.mxu0 0.0
  %832 = vmatprep.mubr.f32.mxu0 0.0
  %833 = vmatmul.mubr.f32.gmra.mrb[0].mxu0 %v721
  %v834 = vpop.f32.mrb[0].mxu0
  %v835 = vadd.f32 %v717, %v834
  %v836 = vpop.f32.mrb[0].mxu0
  %837 = vmatprep.mubr.f32.mxu0 0.0
  %838 = vmatmul.mubr.f32.gmra.mrb[0].mxu0 %v724
  %v839 = vpop.f32.mrb[0].mxu0
  %v840 = vadd.f32 %v717, %v839
  %v841 = vpop.f32.mrb[0].mxu0
  %842 = vmatprep.mubr.f32.mxu0 0.0
  %843 = vmatmul.mubr.f32.gmra.mrb[0].mxu0 %v727
  %v844 = vpop.f32.mrb[0].mxu0
  %v845 = vadd.f32 %v717, %v844
  %v846 = vpop.f32.mrb[0].mxu0
  %847 = vmatprep.mubr.f32.mxu0 0.0
  %848 = vmatmul.mubr.f32.gmra.mrb[0].mxu0 %v730
  %v849 = vpop.f32.mrb[0].mxu0
  %v850 = vadd.f32 %v717, %v849
  %v851 = vpop.f32.mrb[0].mxu0
  %852 = vmatprep.mubr.f32.mxu0 0.0
  %853 = vmatmul.mubr.f32.gmra.mrb[0].mxu0 %v733
  %v854 = vpop.f32.mrb[0].mxu0
  %v855 = vadd.f32 %v717, %v854
  %v856 = vpop.f32.mrb[0].mxu0
  %857 = vmatprep.mubr.f32.mxu0 0.0
  %858 = vmatmul.mubr.f32.gmra.mrb[0].mxu0 %v736
  %v859 = vpop.f32.mrb[0].mxu0
  %v860 = vadd.f32 %v717, %v859
  %v861 = vpop.f32.mrb[0].mxu0
  %862 = vmatprep.mubr.f32.mxu0 0.0
  %863 = vmatmul.mubr.f32.gmra.mrb[0].mxu0 %v739
  %v864 = vpop.f32.mrb[0].mxu0
  %v865 = vadd.f32 %v717, %v864
  %v866 = vpop.f32.mrb[0].mxu0
  %867 = vmatprep.mubr.f32.mxu0 0.0
  %868 = vmatmul.mubr.f32.gmra.mrb[0].mxu0 %v742
  %v869 = vpop.f32.mrb[0].mxu0
  %v870 = vadd.f32 %v717, %v869
  %v871 = vpop.f32.mrb[0].mxu0
  %872 = vmatprep.mubr.f32.mxu0 0.0
  %873 = vmatmul.mubr.f32.gmra.mrb[0].mxu0 %v745
  %v874 = vpop.f32.mrb[0].mxu0
  %v875 = vadd.f32 %v717, %v874
  %v876 = vpop.f32.mrb[0].mxu0
  %877 = vmatprep.mubr.f32.mxu0 0.0
  %878 = vmatmul.mubr.f32.gmra.mrb[0].mxu0 %v748
  %v879 = vpop.f32.mrb[0].mxu0
  %v880 = vadd.f32 %v717, %v879
  %v881 = vpop.f32.mrb[0].mxu0
  %882 = vmatprep.mubr.f32.mxu0 0.0
  %883 = vmatmul.mubr.f32.gmra.mrb[0].mxu0 %v751
  %v884 = vpop.f32.mrb[0].mxu0
  %v885 = vadd.f32 %v717, %v884
  %v886 = vpop.f32.mrb[0].mxu0
  %887 = vmatprep.mubr.f32.mxu0 0.0
  %888 = vmatmul.mubr.f32.gmra.mrb[0].mxu0 %v754
  %v889 = vpop.f32.mrb[0].mxu0
  %v890 = vadd.f32 %v717, %v889
  %v891 = vpop.f32.mrb[0].mxu0
  %892 = vmatprep.mubr.f32.mxu0 0.0
  %893 = vmatmul.mubr.f32.gmra.mrb[0].mxu0 %v757
  %v894 = vpop.f32.mrb[0].mxu0
  %v895 = vadd.f32 %v717, %v894
  %v896 = vpop.f32.mrb[0].mxu0
  %897 = vmatprep.mubr.f32.mxu0 0.0
  %898 = vmatmul.mubr.f32.gmra.mrb[0].mxu0 %v760
  %v899 = vpop.f32.mrb[0].mxu0
  %v900 = vadd.f32 %v717, %v899
  %v901 = vpop.f32.mrb[0].mxu0
  %902 = vmatprep.mubr.f32.mxu0 0.0
  %903 = vmatmul.mubr.f32.gmra.mrb[0].mxu0 %v763
  %v904 = vpop.f32.mrb[0].mxu0
  %v905 = vadd.f32 %v717, %v904
  %v906 = vpop.f32.mrb[0].mxu0
  %907 = vmatprep.mubr.f32.mxu0 0.0
  %908 = vmatmul.mubr.f32.gmra.mrb[0].mxu0 %v766
  %v909 = vpop.f32.mrb[0].mxu0
  %v910 = vadd.f32 %v717, %v909
  %v911 = vpop.f32.mrb[0].mxu0
  %912 = vdwg.mxu0
  %vm913 = vcmask 523264
  %914 = vst.msk [vmem:[%s9] sm:$0xff] %vm913, %v835
  %915 = vst.msk [vmem:[%s9 + $0x8] sm:$0xff] %vm913, %v840
  %916 = vst.msk [vmem:[%s9 + $0x10] sm:$0xff] %vm913, %v845
  %917 = vst.msk [vmem:[%s9 + $0x18] sm:$0xff] %vm913, %v850
  %918 = vst.msk [vmem:[%s9 + $0x20] sm:$0xff] %vm913, %v855
  %919 = vst.msk [vmem:[%s9 + $0x28] sm:$0xff] %vm913, %v860
  %920 = vst.msk [vmem:[%s9 + $0x30] sm:$0xff] %vm913, %v865
  %921 = vst.msk [vmem:[%s9 + $0x38] sm:$0xff] %vm913, %v870
  %922 = vst.msk [vmem:[%s9 + $0x40] sm:$0xff] %vm913, %v875
  %923 = vst.msk [vmem:[%s9 + $0x48] sm:$0xff] %vm913, %v880
  %924 = vst.msk [vmem:[%s9 + $0x50] sm:$0xff] %vm913, %v885
  %925 = vst.msk [vmem:[%s9 + $0x58] sm:$0xff] %vm913, %v890
  %926 = vst.msk [vmem:[%s9 + $0x60] sm:$0xff] %vm913, %v895
  %927 = vst.msk [vmem:[%s9 + $0x68] sm:$0xff] %vm913, %v900
  %928 = vst.msk [vmem:[%s9 + $0x70] sm:$0xff] %vm913, %v905
  %929 = vst.msk [vmem:[%s9 + $0x78] sm:$0xff] %vm913, %v910
  // Predicated region
  $region38: #{tpu_custom_call.1} parent=0 // pred_check
    _
  $region39: #{tpu_custom_call.1} parent=0 // pred_check_branch
    %931 = sbr.rel (0) target = $region41
  $region40: #{tpu_custom_call.1} parent=0 // pred_region
    _
  $region41: #{tpu_custom_call.1} parent=0 // pred_fallthru
    _
  // Predicated region
  $region42: #{tpu_custom_call.1} parent=0 // pred_check
    _
  $region43: #{tpu_custom_call.1} parent=0 // pred_check_branch
    %933 = sbr.rel (0) target = $region45
  $region44: #{tpu_custom_call.1} parent=0 // pred_region
    _
  $region45: #{tpu_custom_call.1} parent=0 // pred_fallthru
    _

</llo_original>
